<compile_context>
chip_gen: v5e
topology: v5e:2x2
jax: 0.10.0
libtpu: 0.0.40
codegen_flags: <defaults>
</compile_context>

<pallas_src>
import jax
import jax.numpy as jnp
from jax.experimental import pallas as pl
from jax.experimental.pallas import tpu as pltpu

LANE = 128  # lane width of a vreg; all layer widths are zero-padded to this


def _round_up(x, m):
    return ((x + m - 1) // m) * m


def _mlp_kernel(x_ref, w1_ref, wrest_ref, b_ref, out_ref):
    """Fused 5-layer MLP on one (TB, in_dim) batch tile.

    Every layer width is padded to 128 lanes (zeros), so each layer is a single
    lane-dense MXU matmul and the final store is an unmasked 128-wide vst.
    MXU operands are bf16 (pre-cast weights); bias add / ReLU are f32 on the VPU.
    """
    mxu_dtype = wrest_ref.dtype
    n_rest = wrest_ref.shape[0]

    # Layer 1: (TB, in_dim) @ (in_dim, 128)
    acc = jnp.dot(x_ref[...].astype(mxu_dtype), w1_ref[...],
                  preferred_element_type=jnp.float32)
    h = jnp.maximum(acc + b_ref[0:1, :], 0.0)

    # Layers 2..5: (TB, 128) @ (128, 128), statically unrolled.
    for l in range(n_rest):
        acc = jnp.dot(h.astype(mxu_dtype), wrest_ref[l],
                      preferred_element_type=jnp.float32)
        acc = acc + b_ref[l + 1:l + 2, :]
        if l < n_rest - 1:
            h = jnp.maximum(acc, 0.0)   # hidden layers: ReLU
        else:
            h = acc                     # output layer: no activation
    out_ref[...] = h.astype(out_ref.dtype)


def _pack_params(params, mxu_dtype):
    """Zero-pad every layer's output width (and hidden input widths) to LANE and pack
    the 5 weights into two buffers and the 5 biases into one f32 buffer.

    Zero padding keeps the math exact: padded activation columns stay exactly zero
    through bias + ReLU, and padded weight rows/columns contribute nothing.
    """
    n_layers = len(params)
    in_dim = params[0][0].shape[0]
    for i, (w, _) in enumerate(params):
        assert w.shape[1] <= LANE, "layer output width must be <= 128"
        if i > 0:
            assert w.shape[0] <= LANE, "hidden width must be <= 128"

    w1, b1 = params[0]
    w1_p = jnp.zeros((in_dim, LANE), mxu_dtype).at[:, :w1.shape[1]].set(
        w1.astype(mxu_dtype))
    wrest = jnp.zeros((n_layers - 1, LANE, LANE), mxu_dtype)
    b_all = jnp.zeros((n_layers, LANE), jnp.float32)
    b_all = b_all.at[0, :b1.shape[-1]].set(
        b1.reshape(-1).astype(jnp.float32))
    for l in range(1, n_layers):
        w, b = params[l]
        wrest = wrest.at[l - 1, :w.shape[0], :w.shape[1]].set(w.astype(mxu_dtype))
        b_all = b_all.at[l, :b.shape[-1]].set(b.reshape(-1).astype(jnp.float32))
    return w1_p, wrest, b_all


def linear_regression_forward(x, params, *, block_batch=512, use_bf16=True):
    """Fused 5-layer MLP forward.

    params = [(W1, b1), ..., (W5, b5)] with W of shape (in_features, out_features)
    (transposed w.r.t. torch's nn.Linear weight) and b of shape (out_features,).
    """
    batch, in_dim = x.shape
    out_dim = params[-1][0].shape[1]
    n_layers = len(params)

    mxu_dtype = jnp.bfloat16 if use_bf16 else jnp.float32
    w1_p, wrest, b_all = _pack_params(params, mxu_dtype)

    # Batch tiling: TB rows per grid step; pad batch up to a multiple of TB.
    tb = _round_up(min(block_batch, _round_up(batch, 8)), 8)
    pb = _round_up(batch, tb)

    x_in = x.astype(mxu_dtype)           # bf16 halves HBM traffic for x
    if pb != batch:
        x_in = jnp.pad(x_in, ((0, pb - batch), (0, 0)))

    grid = (pb // tb,)
    flops = 2 * pb * (in_dim * LANE + (n_layers - 1) * LANE * LANE)
    bytes_accessed = (x_in.size * x_in.dtype.itemsize
                      + w1_p.size * w1_p.dtype.itemsize
                      + wrest.size * wrest.dtype.itemsize
                      + b_all.size * b_all.dtype.itemsize
                      + pb * LANE * 4)

    out_padded = pl.pallas_call(
        _mlp_kernel,
        out_shape=jax.ShapeDtypeStruct((pb, LANE), jnp.float32),
        grid=grid,
        in_specs=[
            # x: one (tb, in_dim) tile per grid step -> pipelined / double-buffered.
            pl.BlockSpec((tb, in_dim), lambda i: (i, 0)),
            # Weights & biases: constant block index -> DMA'd once, VMEM-resident.
            pl.BlockSpec((in_dim, LANE), lambda i: (0, 0)),
            pl.BlockSpec((n_layers - 1, LANE, LANE), lambda i: (0, 0, 0)),
            pl.BlockSpec((n_layers, LANE), lambda i: (0, 0)),
        ],
        # Lane-dense (tb, 128) output block -> unmasked stores.
        out_specs=pl.BlockSpec((tb, LANE), lambda i: (i, 0)),
        compiler_params=pltpu.CompilerParams(
            dimension_semantics=("parallel",)),
        cost_estimate=pl.CostEstimate(flops=flops, transcendentals=0,
                                      bytes_accessed=bytes_accessed),
    )(x_in, w1_p, wrest, b_all)

    # Strip batch padding and the 128-lane padding of the final layer.
    return out_padded[:batch, :out_dim]


def init_params(key, dims):
    """Deterministic init for Linear layers (uniform, roughly matching torch's scheme)."""
    params = []
    for i in range(len(dims) - 1):
        fan_in, fan_out = dims[i], dims[i + 1]
        key, kw, kb = jax.random.split(key, 3)
        bound = 1.0 / jnp.sqrt(jnp.float32(fan_in))
        w = jax.random.uniform(kw, (fan_in, fan_out), jnp.float32, -bound, bound)
        b = jax.random.uniform(kb, (fan_out,), jnp.float32, -bound, bound)
        params.append((w, b))
    return params


def reference_forward(x, params):
    h = x
    for i, (w, b) in enumerate(params):
        h = h @ w + b
        if i < len(params) - 1:
            h = jnp.maximum(h, 0.0)
    return h


if __name__ == "__main__":
    # input_dim=16, hidden1=32, hidden2=64, hidden3=32, hidden4=16, output_dim=4
    dims = (16, 32, 64, 32, 16, 4)
    batch = 256  # small, but enough for the batch grid (2 tiles of 128) to engage

    key = jax.random.PRNGKey(0)
    key, kx = jax.random.split(key)
    x = jax.random.normal(kx, (batch, dims[0]), jnp.float32)
    params = init_params(key, dims)

    out = linear_regression_forward(x, params, block_batch=128)
    out = jax.block_until_ready(out)

    ref = reference_forward(x, params)
    assert out.shape == (batch, dims[-1])
    # bf16 MXU operands -> small (~1%) numerical difference vs the pure-f32 reference.
    assert jnp.allclose(out, ref, atol=3e-2, rtol=3e-2), "mismatch vs reference"

    print("KERNEL_OK")
</pallas_src>

<mosaic_0001>
module attributes {stable_mosaic.version = 11 : i64} {
  func.func @_mlp_kernel(%arg0: i32, %arg1: memref<128x16xbf16, #tpu.memory_space<vmem>>, %arg2: memref<16x128xbf16, #tpu.memory_space<vmem>>, %arg3: memref<4x128x128xbf16, #tpu.memory_space<vmem>>, %arg4: memref<5x128xf32, #tpu.memory_space<vmem>>, %arg5: memref<128x128xf32, #tpu.memory_space<vmem>>) attributes {dimension_semantics = [#tpu.dimension_semantics<parallel>], iteration_bounds = array<i64: 2>, scalar_prefetch = 0 : i64, scratch_operands = 0 : i64, tpu.core_type = #tpu.core_type<tc>, window_params = [{transform_indices = @transform_0, window_bounds = array<i64: 128, 16>}, {pipeline_mode = #tpu.pipeline_mode<synchronous>, transform_indices = @transform_1, window_bounds = array<i64: 16, 128>}, {pipeline_mode = #tpu.pipeline_mode<synchronous>, transform_indices = @transform_2, window_bounds = array<i64: 4, 128, 128>}, {pipeline_mode = #tpu.pipeline_mode<synchronous>, transform_indices = @transform_3, window_bounds = array<i64: 5, 128>}, {transform_indices = @transform_4, window_bounds = array<i64: 128, 128>}]} {
    %c0 = arith.constant 0 : index
    %c0_0 = arith.constant 0 : index
    %0 = vector.load %arg1[%c0, %c0_0] : memref<128x16xbf16, #tpu.memory_space<vmem>>, vector<128x16xbf16>
    %c0_1 = arith.constant 0 : index
    %c0_2 = arith.constant 0 : index
    %1 = vector.load %arg2[%c0_1, %c0_2] : memref<16x128xbf16, #tpu.memory_space<vmem>>, vector<16x128xbf16>
    %cst = arith.constant dense<0.000000e+00> : vector<128x128xf32>
    %2 = tpu.matmul %0, %1, %cst {dimension_numbers = #tpu.dot_dimension_numbers<[1], [0], [0], [1], [0, 0, 1, 1], [], []>} : vector<128x16xbf16>, vector<16x128xbf16>, vector<128x128xf32> -> vector<128x128xf32>
    %c0_3 = arith.constant 0 : index
    %c0_4 = arith.constant 0 : index
    %3 = vector.load %arg4[%c0_3, %c0_4] : memref<5x128xf32, #tpu.memory_space<vmem>>, vector<1x128xf32>
    %4 = vector.broadcast %3 : vector<1x128xf32> to vector<128x128xf32>
    %5 = arith.addf %2, %4 : vector<128x128xf32>
    %cst_5 = arith.constant 0.000000e+00 : f32
    %6 = vector.broadcast %cst_5 : f32 to vector<128x128xf32>
    %7 = arith.maximumf %5, %6 : vector<128x128xf32>
    %8 = arith.truncf %7 : vector<128x128xf32> to vector<128x128xbf16>
    %c0_6 = arith.constant 0 : index
    %c0_7 = arith.constant 0 : index
    %c0_8 = arith.constant 0 : index
    %9 = vector.load %arg3[%c0_6, %c0_7, %c0_8] : memref<4x128x128xbf16, #tpu.memory_space<vmem>>, vector<1x128x128xbf16>
    %10 = vector.shape_cast %9 : vector<1x128x128xbf16> to vector<128x128xbf16>
    %cst_9 = arith.constant dense<0.000000e+00> : vector<128x128xf32>
    %11 = tpu.matmul %8, %10, %cst_9 {dimension_numbers = #tpu.dot_dimension_numbers<[1], [0], [0], [1], [0, 0, 1, 1], [], []>} : vector<128x128xbf16>, vector<128x128xbf16>, vector<128x128xf32> -> vector<128x128xf32>
    %c1 = arith.constant 1 : index
    %c0_10 = arith.constant 0 : index
    %12 = vector.load %arg4[%c1, %c0_10] : memref<5x128xf32, #tpu.memory_space<vmem>>, vector<1x128xf32>
    %13 = vector.broadcast %12 : vector<1x128xf32> to vector<128x128xf32>
    %14 = arith.addf %11, %13 : vector<128x128xf32>
    %cst_11 = arith.constant 0.000000e+00 : f32
    %15 = vector.broadcast %cst_11 : f32 to vector<128x128xf32>
    %16 = arith.maximumf %14, %15 : vector<128x128xf32>
    %17 = arith.truncf %16 : vector<128x128xf32> to vector<128x128xbf16>
    %c1_12 = arith.constant 1 : index
    %c0_13 = arith.constant 0 : index
    %c0_14 = arith.constant 0 : index
    %18 = vector.load %arg3[%c1_12, %c0_13, %c0_14] : memref<4x128x128xbf16, #tpu.memory_space<vmem>>, vector<1x128x128xbf16>
    %19 = vector.shape_cast %18 : vector<1x128x128xbf16> to vector<128x128xbf16>
    %cst_15 = arith.constant dense<0.000000e+00> : vector<128x128xf32>
    %20 = tpu.matmul %17, %19, %cst_15 {dimension_numbers = #tpu.dot_dimension_numbers<[1], [0], [0], [1], [0, 0, 1, 1], [], []>} : vector<128x128xbf16>, vector<128x128xbf16>, vector<128x128xf32> -> vector<128x128xf32>
    %c2 = arith.constant 2 : index
    %c0_16 = arith.constant 0 : index
    %21 = vector.load %arg4[%c2, %c0_16] : memref<5x128xf32, #tpu.memory_space<vmem>>, vector<1x128xf32>
    %22 = vector.broadcast %21 : vector<1x128xf32> to vector<128x128xf32>
    %23 = arith.addf %20, %22 : vector<128x128xf32>
    %cst_17 = arith.constant 0.000000e+00 : f32
    %24 = vector.broadcast %cst_17 : f32 to vector<128x128xf32>
    %25 = arith.maximumf %23, %24 : vector<128x128xf32>
    %26 = arith.truncf %25 : vector<128x128xf32> to vector<128x128xbf16>
    %c2_18 = arith.constant 2 : index
    %c0_19 = arith.constant 0 : index
    %c0_20 = arith.constant 0 : index
    %27 = vector.load %arg3[%c2_18, %c0_19, %c0_20] : memref<4x128x128xbf16, #tpu.memory_space<vmem>>, vector<1x128x128xbf16>
    %28 = vector.shape_cast %27 : vector<1x128x128xbf16> to vector<128x128xbf16>
    %cst_21 = arith.constant dense<0.000000e+00> : vector<128x128xf32>
    %29 = tpu.matmul %26, %28, %cst_21 {dimension_numbers = #tpu.dot_dimension_numbers<[1], [0], [0], [1], [0, 0, 1, 1], [], []>} : vector<128x128xbf16>, vector<128x128xbf16>, vector<128x128xf32> -> vector<128x128xf32>
    %c3 = arith.constant 3 : index
    %c0_22 = arith.constant 0 : index
    %30 = vector.load %arg4[%c3, %c0_22] : memref<5x128xf32, #tpu.memory_space<vmem>>, vector<1x128xf32>
    %31 = vector.broadcast %30 : vector<1x128xf32> to vector<128x128xf32>
    %32 = arith.addf %29, %31 : vector<128x128xf32>
    %cst_23 = arith.constant 0.000000e+00 : f32
    %33 = vector.broadcast %cst_23 : f32 to vector<128x128xf32>
    %34 = arith.maximumf %32, %33 : vector<128x128xf32>
    %35 = arith.truncf %34 : vector<128x128xf32> to vector<128x128xbf16>
    %c3_24 = arith.constant 3 : index
    %c0_25 = arith.constant 0 : index
    %c0_26 = arith.constant 0 : index
    %36 = vector.load %arg3[%c3_24, %c0_25, %c0_26] : memref<4x128x128xbf16, #tpu.memory_space<vmem>>, vector<1x128x128xbf16>
    %37 = vector.shape_cast %36 : vector<1x128x128xbf16> to vector<128x128xbf16>
    %cst_27 = arith.constant dense<0.000000e+00> : vector<128x128xf32>
    %38 = tpu.matmul %35, %37, %cst_27 {dimension_numbers = #tpu.dot_dimension_numbers<[1], [0], [0], [1], [0, 0, 1, 1], [], []>} : vector<128x128xbf16>, vector<128x128xbf16>, vector<128x128xf32> -> vector<128x128xf32>
    %c4 = arith.constant 4 : index
    %c0_28 = arith.constant 0 : index
    %39 = vector.load %arg4[%c4, %c0_28] : memref<5x128xf32, #tpu.memory_space<vmem>>, vector<1x128xf32>
    %40 = vector.broadcast %39 : vector<1x128xf32> to vector<128x128xf32>
    %41 = arith.addf %38, %40 : vector<128x128xf32>
    %c0_29 = arith.constant 0 : index
    %c0_30 = arith.constant 0 : index
    %42 = vector.load %arg5[%c0_29, %c0_30] : memref<128x128xf32, #tpu.memory_space<vmem>>, vector<128x128xf32>
    tpu.vector_store %arg5[%c0_29, %c0_30], %41 {strides = array<i32>} : memref<128x128xf32, #tpu.memory_space<vmem>>, vector<128x128xf32>,
    return
  }
  func.func @transform_0(%arg0: i32) -> (i32, i32) {
    %c0_i32 = arith.constant 0 : i32
    %c0_i32_0 = arith.constant 0 : i32
    return %arg0, %c0_i32 : i32, i32
  }
  func.func @transform_1(%arg0: i32) -> (i32, i32) {
    %c0_i32 = arith.constant 0 : i32
    %c0_i32_0 = arith.constant 0 : i32
    %c0_i32_1 = arith.constant 0 : i32
    return %c0_i32, %c0_i32_0 : i32, i32
  }
  func.func @transform_2(%arg0: i32) -> (i32, i32, i32) {
    %c0_i32 = arith.constant 0 : i32
    %c0_i32_0 = arith.constant 0 : i32
    %c0_i32_1 = arith.constant 0 : i32
    %c0_i32_2 = arith.constant 0 : i32
    return %c0_i32, %c0_i32_0, %c0_i32_1 : i32, i32, i32
  }
  func.func @transform_3(%arg0: i32) -> (i32, i32) {
    %c0_i32 = arith.constant 0 : i32
    %c0_i32_0 = arith.constant 0 : i32
    %c0_i32_1 = arith.constant 0 : i32
    return %c0_i32, %c0_i32_0 : i32, i32
  }
  func.func @transform_4(%arg0: i32) -> (i32, i32) {
    %c0_i32 = arith.constant 0 : i32
    %c0_i32_0 = arith.constant 0 : i32
    return %arg0, %c0_i32 : i32, i32
  }
}

</mosaic_0001>

<llo_original>
// kernel: tpu_custom_call.1
$region0: #{tpu_custom_call.1}
  #allocation0 [shape = 'u32[]', space=smem, size = 0x4, offset = 0x4, fixed_abs, tag = 'smem constant byte address 0x4 - core index']
  #allocation1 [shape = 'u32[72,128]{1,0:T(1,128)}', space=vmem, size = 0x9000, scoped, tag = 'internal scratch']
  %s0 = inlined_call_operand.vmem [shape: bf16[256,16], index: 0, kind: input, shape index: {}]
  %s1 = inlined_call_operand.vmem [shape: bf16[16,128], index: 1, kind: input, shape index: {}]
  %s2 = inlined_call_operand.hbm [shape: bf16[4,128,128], index: 2, kind: input, shape index: {}]
  %s3 = inlined_call_operand.vmem [shape: f32[5,128], index: 3, kind: input, shape index: {}]
  %s4 = inlined_call_operand.hbm [shape: f32[256,128], index: 4, kind: output, shape index: {}]
  %s5 = sld [smem:[#allocation0]]
  $region53: #{tpu_custom_call.1} parent=0
    _
  %s7 = ssub.s32 1, %s5
  %s8 = scalar_select 0, %s7, %s5
  $region1: #{tpu_custom_call.1} parent=0
    #allocation2 [shape = 'u8[131072]{0}', space=vmem, size = 0x20000, scoped, tag = 'input window, operand 2, single buffered']
    #allocation3 [shape = 's32[2]{0}', space=sflag, size = 0x8, scoped, tag = 'scoped memory for tpu_custom_call.1']
    #allocation4 [shape = 's32[2]{0}', space=sflag, size = 0x8, scoped, tag = 'scoped memory for tpu_custom_call.1']
    #allocation5 [shape = 'u8[131072]{0}', space=vmem, size = 0x20000, scoped, tag = 'output window, operand 0']
    %9 = vsyncpa [#allocation3], 0
    %10 = vsyncpa [#allocation4], 0
    %s11 = scalar_lea.sflag [#allocation4], 1
    %12 = vsyncpa %s11, 0
    loop: start=0, step=1, limit=4
    $region2: #{tpu_custom_call.1} parent=1 // loop_pre_header
      _
    $region3: #{tpu_custom_call.1} parent=1 // loop_header
      %s14 = sphi 0, %s18
      %p15 = scmp.ge.s32.totalorder %s14, 4
      %s24 = sphi 0, %s26
      %s27 = sphi 0, %s24
      %s28 = sphi 0, %s27
      %s44 = sphi 0, %s28
      %s48 = sphi 0, %s48
      %s50 = sphi 0, %s48
      %s51 = sphi 0, %s50
      %s65 = sphi 0, %s51
      %s69 = sphi 0, %s69
      %s71 = sphi 0, %s69
      %s72 = sphi 0, %s71
      %s86 = sphi 0, %s72
      %s90 = sphi 0, %s90
      %s92 = sphi 0, %s90
      %s93 = sphi 0, %s92
      %s107 = sphi 0, %s93
      %s113 = sphi 0, %s115
      %s116 = sphi 0, %s113
      %s117 = sphi 0, %s116
      %s133 = sphi 0, %s117
    $region4: #{tpu_custom_call.1} parent=1 // loop_header_branch
      %17 = sbr.rel (%p15) target = $region8
    $region5: #{tpu_custom_call.1} parent=1 // loop_body
      %s19 = ssub.s32 %s14, 1
      %s20 = ssub.s32 %s14, 2
      %s21 = sadd.s32 %s14, 1
      %s22 = ssub.s32 %s14, %s21
      %p23 = scmp.eq.s32.totalorder %s22, 0
      %s25 = sadd.s32 %s24, 1
      %s26 = scalar_select %p23, %s24, %s25
      %p29 = pneg %p23
      %p30 = scmp.eq.s32.totalorder %s14, 1
      %p31 = por %p29, %p30
      %p32 = scmp.ne.s32.totalorder %s24, %s27
      %p33 = scmp.eq.s32.totalorder %s14, 0
      %p34 = por %p32, %p33
      %p35 = scmp.ne.s32.totalorder %s24, %s27
      %p36 = scmp.eq.s32.totalorder %s19, 1
      %p37 = por %p35, %p36
      %p38 = scmp.ne.s32.totalorder %s27, %s28
      %p39 = scmp.eq.s32.totalorder %s19, 0
      %p40 = por %p38, %p39
      %p41 = scmp.ne.s32.totalorder %s27, %s28
      %p42 = scmp.eq.s32.totalorder %s20, 1
      %p43 = por %p41, %p42
      %p45 = scmp.ne.s32.totalorder %s28, %s44
      %p46 = scmp.eq.s32.totalorder %s20, 0
      %p47 = por %p45, %p46
      %s49 = sadd.s32 %s48, 1
      %p52 = scmp.eq.s32.totalorder %s14, 1
      %p53 = scmp.ne.s32.totalorder %s48, %s50
      %p54 = scmp.eq.s32.totalorder %s14, 0
      %p55 = por %p53, %p54
      %p56 = scmp.ne.s32.totalorder %s48, %s50
      %p57 = scmp.eq.s32.totalorder %s19, 1
      %p58 = por %p56, %p57
      %p59 = scmp.ne.s32.totalorder %s50, %s51
      %p60 = scmp.eq.s32.totalorder %s19, 0
      %p61 = por %p59, %p60
      %p62 = scmp.ne.s32.totalorder %s50, %s51
      %p63 = scmp.eq.s32.totalorder %s20, 1
      %p64 = por %p62, %p63
      %p66 = scmp.ne.s32.totalorder %s51, %s65
      %p67 = scmp.eq.s32.totalorder %s20, 0
      %p68 = por %p66, %p67
      %s70 = sadd.s32 %s69, 1
      %p73 = scmp.eq.s32.totalorder %s14, 1
      %p74 = scmp.ne.s32.totalorder %s69, %s71
      %p75 = scmp.eq.s32.totalorder %s14, 0
      %p76 = por %p74, %p75
      %p77 = scmp.ne.s32.totalorder %s69, %s71
      %p78 = scmp.eq.s32.totalorder %s19, 1
      %p79 = por %p77, %p78
      %p80 = scmp.ne.s32.totalorder %s71, %s72
      %p81 = scmp.eq.s32.totalorder %s19, 0
      %p82 = por %p80, %p81
      %p83 = scmp.ne.s32.totalorder %s71, %s72
      %p84 = scmp.eq.s32.totalorder %s20, 1
      %p85 = por %p83, %p84
      %p87 = scmp.ne.s32.totalorder %s72, %s86
      %p88 = scmp.eq.s32.totalorder %s20, 0
      %p89 = por %p87, %p88
      %s91 = sadd.s32 %s90, 1
      %p94 = scmp.eq.s32.totalorder %s14, 1
      %p95 = scmp.ne.s32.totalorder %s90, %s92
      %p96 = scmp.eq.s32.totalorder %s14, 0
      %p97 = por %p95, %p96
      %p98 = scmp.ne.s32.totalorder %s90, %s92
      %p99 = scmp.eq.s32.totalorder %s19, 1
      %p100 = por %p98, %p99
      %p101 = scmp.ne.s32.totalorder %s92, %s93
      %p102 = scmp.eq.s32.totalorder %s19, 0
      %p103 = por %p101, %p102
      %p104 = scmp.ne.s32.totalorder %s92, %s93
      %p105 = scmp.eq.s32.totalorder %s20, 1
      %p106 = por %p104, %p105
      %p108 = scmp.ne.s32.totalorder %s93, %s107
      %p109 = scmp.eq.s32.totalorder %s20, 0
      %p110 = por %p108, %p109
      %s111 = ssub.s32 %s14, %s21
      %p112 = scmp.eq.s32.totalorder %s111, 0
      %s114 = sadd.s32 %s113, 1
      %s115 = scalar_select %p112, %s113, %s114
      %p118 = pneg %p112
      %p119 = scmp.eq.s32.totalorder %s14, 1
      %p120 = por %p118, %p119
      %p121 = scmp.ne.s32.totalorder %s113, %s116
      %p122 = scmp.eq.s32.totalorder %s14, 0
      %p123 = por %p121, %p122
      %p124 = scmp.ne.s32.totalorder %s113, %s116
      %p125 = scmp.eq.s32.totalorder %s19, 1
      %p126 = por %p124, %p125
      %p127 = scmp.ne.s32.totalorder %s116, %s117
      %p128 = scmp.eq.s32.totalorder %s19, 0
      %p129 = por %p127, %p128
      %p130 = scmp.ne.s32.totalorder %s116, %s117
      %p131 = scmp.eq.s32.totalorder %s20, 1
      %p132 = por %p130, %p131
      %p134 = scmp.ne.s32.totalorder %s117, %s133
      %p135 = scmp.eq.s32.totalorder %s20, 0
      %p136 = por %p134, %p135
      %p137 = scmp.le.s32.totalorder 1, %s14
      %p138 = scmp.lt.s32.totalorder %s14, 3
      %p139 = pnand %p137, %p138
      %p140 = pneg %p139
      // Predicated region
      $region9: #{tpu_custom_call.1} parent=5 // pred_check
        _
      $region10: #{tpu_custom_call.1} parent=5 // pred_check_branch
        %142 = sbr.rel (%p139) target = $region12
      $region11: #{tpu_custom_call.1} parent=5 // pred_region
        %s143 = ssub.s32 %s14, 1
        // Predicated region
        $region13: #{tpu_custom_call.1} parent=11 // pred_check
          %p144 = pneg %p61
        $region14: #{tpu_custom_call.1} parent=11 // pred_check_branch
          %146 = sbr.rel (%p144) target = $region16
        $region15: #{tpu_custom_call.1} parent=11 // pred_region
          _
        $region16: #{tpu_custom_call.1} parent=11 // pred_fallthru
          _
        // Predicated region
        $region17: #{tpu_custom_call.1} parent=11 // pred_check
          %p147 = pneg %p82
        $region18: #{tpu_custom_call.1} parent=11 // pred_check_branch
          %149 = sbr.rel (%p147) target = $region20
        $region19: #{tpu_custom_call.1} parent=11 // pred_region
          %151 = vsyncadd [#allocation3], 0
          %s152 = sshll.u32 %s2, 4
          %s153 = int_to_ptr.hbm [resolvable:$true] %s152
          %s154 = sshll.u32 [#allocation2], 4
          %s155 = int_to_ptr.vmem [resolvable:$true] %s154
          %160 = dma.hbm_to_vmem [thread:$0]  %s153, 4096, %s155, [#allocation3], 64, 64, 4
        $region20: #{tpu_custom_call.1} parent=11 // pred_fallthru
          _
        // Predicated region
        $region21: #{tpu_custom_call.1} parent=11 // pred_check
          %p161 = pneg %p103
        $region22: #{tpu_custom_call.1} parent=11 // pred_check_branch
          %163 = sbr.rel (%p161) target = $region24
        $region23: #{tpu_custom_call.1} parent=11 // pred_region
          _
        $region24: #{tpu_custom_call.1} parent=11 // pred_fallthru
          _
      $region12: #{tpu_custom_call.1} parent=5 // pred_fallthru
        _
      %p164 = scmp.lt.s32.totalorder %s14, 2
      // Predicated region
      $region25: #{tpu_custom_call.1} parent=5 // pred_check
        %p165 = pneg %p164
      $region26: #{tpu_custom_call.1} parent=5 // pred_check_branch
        %167 = sbr.rel (%p165) target = $region28
      $region27: #{tpu_custom_call.1} parent=5 // pred_region
        // Predicated region
        $region29: #{tpu_custom_call.1} parent=27 // pred_check
          %p168 = pneg %p34
        $region30: #{tpu_custom_call.1} parent=27 // pred_check_branch
          %170 = sbr.rel (%p168) target = $region32
        $region31: #{tpu_custom_call.1} parent=27 // pred_region
          %s171 = smul.u32 16, %s14
          %p172 = scmp.lt.s32.totalorder %s171, 31
          %s173 = scalar_select %p172, %s171, 31
          %s174 = smul.addr %s173, 4
          %s175 = scalar_lea.vmem %s0, %s174
          %s176 = smul.u32 16, %s14
        $region32: #{tpu_custom_call.1} parent=27 // pred_fallthru
          _
      $region28: #{tpu_custom_call.1} parent=5 // pred_fallthru
        _
      %p177 = scmp.le.s32.totalorder 1, %s14
      %p178 = scmp.lt.s32.totalorder %s14, 3
      %p179 = pnand %p177, %p178
      %p180 = pneg %p179
      // Predicated region
      $region33: #{tpu_custom_call.1} parent=5 // pred_check
        _
      $region34: #{tpu_custom_call.1} parent=5 // pred_check_branch
        %182 = sbr.rel (%p179) target = $region36
      $region35: #{tpu_custom_call.1} parent=5 // pred_region
        %s183 = ssub.s32 %s14, 1
        // Predicated region
        $region37: #{tpu_custom_call.1} parent=35 // pred_check
          %p184 = pneg %p82
        $region38: #{tpu_custom_call.1} parent=35 // pred_check_branch
          %186 = sbr.rel (%p184) target = $region40
        $region39: #{tpu_custom_call.1} parent=35 // pred_region
          %188 = dma.done [#allocation3], 4096
        $region40: #{tpu_custom_call.1} parent=35 // pred_fallthru
          _
        %s189 = smul.u32 16, %s19
        %p190 = scmp.lt.s32.totalorder %s189, 31
        %s191 = scalar_select %p190, %s189, 31
        %s192 = smul.addr %s191, 4
        %s193 = scalar_lea.vmem %s0, %s192
        %p194 = pneg %p40
        %p195 = pneg %p37
        %p196 = pneg %p61
        %p197 = pneg %p58
        %p198 = pneg %p82
        %p199 = pneg %p79
        %p200 = pneg %p103
        %p201 = pneg %p100
        %p202 = pneg %p129
        %p203 = pneg %p126
        %s204 = sand.u32 %s116, 1
        %s205 = scalar_lea.sflag [#allocation4], %s204
        %s206 = sand.u32 %s116, 1
        %s207 = smul.addr %s206, 128
        %s208 = scalar_lea.vmem [#allocation5], %s207
        %s209 = smul.u32 16, %s19
        %p210 = scmp.lt.s32.totalorder %s209, 31
        %s211 = scalar_select %p210, %s209, 31
        %s212 = smul.addr %s211, 4
        %s213 = scalar_lea.vmem %s0, %s212
        %s214 = smul.u32 16, %s19
        %s215 = smul.u32 16, %s19
        %v217 = vld [vmem:[%s213] sm:$0xf]
        %v218 = vld [vmem:[%s213 + $0x4] sm:$0xf]
        %v219 = vld [vmem:[%s213 + $0x8] sm:$0xf]
        %v220 = vld [vmem:[%s213 + $0xc] sm:$0xf]
        %v221 = vld [vmem:[%s213 + $0x10] sm:$0xf]
        %v222 = vld [vmem:[%s213 + $0x14] sm:$0xf]
        %v223 = vld [vmem:[%s213 + $0x18] sm:$0xf]
        %v224 = vld [vmem:[%s213 + $0x1c] sm:$0xf]
        %v225 = vld [vmem:[%s213 + $0x20] sm:$0xf]
        %v226 = vld [vmem:[%s213 + $0x24] sm:$0xf]
        %v227 = vld [vmem:[%s213 + $0x28] sm:$0xf]
        %v228 = vld [vmem:[%s213 + $0x2c] sm:$0xf]
        %v229 = vld [vmem:[%s213 + $0x30] sm:$0xf]
        %v230 = vld [vmem:[%s213 + $0x34] sm:$0xf]
        %v231 = vld [vmem:[%s213 + $0x38] sm:$0xf]
        %v232 = vld [vmem:[%s213 + $0x3c] sm:$0xf]
        %v233 = vld [vmem:[%s1] sm:$0xf]
        %v234 = vld [vmem:[%s1 + $0x4] sm:$0xf]
        %v235 = vld [vmem:[%s3] sm:$0x1]
        %v236 = vperm.slane %v235, 0
        %v253 = vunpack.c.l.b16 %v217
        %v254 = vunpack.c.l.b16 %v218
        %v255 = vunpack.c.l.b16 %v219
        %v256 = vunpack.c.l.b16 %v220
        %v257 = vunpack.c.l.b16 %v221
        %v258 = vunpack.c.l.b16 %v222
        %v259 = vunpack.c.l.b16 %v223
        %v260 = vunpack.c.l.b16 %v224
        %v261 = vunpack.c.l.b16 %v225
        %v262 = vunpack.c.l.b16 %v226
        %v263 = vunpack.c.l.b16 %v227
        %v264 = vunpack.c.l.b16 %v228
        %v265 = vunpack.c.l.b16 %v229
        %v266 = vunpack.c.l.b16 %v230
        %v267 = vunpack.c.l.b16 %v231
        %v268 = vunpack.c.l.b16 %v232
        %v269 = vpack.c.b16 %v254, %v253
        %v270 = vpack.c.b16 %v256, %v255
        %v271 = vpack.c.b16 %v258, %v257
        %v272 = vpack.c.b16 %v260, %v259
        %v273 = vpack.c.b16 %v262, %v261
        %v274 = vpack.c.b16 %v264, %v263
        %v275 = vpack.c.b16 %v266, %v265
        %v276 = vpack.c.b16 %v268, %v267
        %v279 = vunpack.c.l.b16 %v233
        %v280 = vunpack.c.l.b16 %v234
        %v281 = vpack.c.b16 %v280, %v279
        %vm283 = vcmask 130048
        %v285 = vsel %vm283, %v269, 0
        %v288 = vsel %vm283, %v270, 0
        %v291 = vsel %vm283, %v271, 0
        %v294 = vsel %vm283, %v272, 0
        %v297 = vsel %vm283, %v273, 0
        %v300 = vsel %vm283, %v274, 0
        %v303 = vsel %vm283, %v275, 0
        %v306 = vsel %vm283, %v276, 0
        %308 = vmatpush.bf16.msra.mxu0 0
        %309 = vmatpush.bf16.msra.mxu0 0
        %310 = vmatpush.bf16.msra.mxu0 0
        %311 = vmatpush.bf16.msra.mxu0 0
        %312 = vmatpush.bf16.msra.mxu0 0
        %313 = vmatpush.bf16.msra.mxu0 0
        %314 = vmatpush.bf16.msra.mxu0 0
        %315 = vmatpush.bf16.msra.mxu0 %v281
        %316 = vmatmul.bf16.gmra.mxu0 %v285
        %v317 = vpop.f32.mrf.mxu0
        %v318 = vadd.f32 %v236, %v317
        %v319 = vpop.f32.mrf.mxu0
        %v320 = vadd.f32 %v236, %v319
        %321 = vmatmul.bf16.gmra.mxu0 %v288
        %v322 = vpop.f32.mrf.mxu0
        %v323 = vadd.f32 %v236, %v322
        %v324 = vpop.f32.mrf.mxu0
        %v325 = vadd.f32 %v236, %v324
        %326 = vmatmul.bf16.gmra.mxu0 %v291
        %v327 = vpop.f32.mrf.mxu0
        %v328 = vadd.f32 %v236, %v327
        %v329 = vpop.f32.mrf.mxu0
        %v330 = vadd.f32 %v236, %v329
        %331 = vmatmul.bf16.gmra.mxu0 %v294
        %v332 = vpop.f32.mrf.mxu0
        %v333 = vadd.f32 %v236, %v332
        %v334 = vpop.f32.mrf.mxu0
        %v335 = vadd.f32 %v236, %v334
        %336 = vmatmul.bf16.gmra.mxu0 %v297
        %v337 = vpop.f32.mrf.mxu0
        %v338 = vadd.f32 %v236, %v337
        %v339 = vpop.f32.mrf.mxu0
        %v340 = vadd.f32 %v236, %v339
        %341 = vmatmul.bf16.gmra.mxu0 %v300
        %v342 = vpop.f32.mrf.mxu0
        %v343 = vadd.f32 %v236, %v342
        %v344 = vpop.f32.mrf.mxu0
        %v345 = vadd.f32 %v236, %v344
        %346 = vmatmul.bf16.gmra.mxu0 %v303
        %v347 = vpop.f32.mrf.mxu0
        %v348 = vadd.f32 %v236, %v347
        %v349 = vpop.f32.mrf.mxu0
        %v350 = vadd.f32 %v236, %v349
        %351 = vmatmul.bf16.gmra.mxu0 %v306
        %v352 = vpop.f32.mrf.mxu0
        %v353 = vadd.f32 %v236, %v352
        %v354 = vpop.f32.mrf.mxu0
        %v355 = vadd.f32 %v236, %v354
        %356 = vdwg.mxu0
        %v357 = vmax.f32 %v318, 0.0
        %v358 = vmax.f32 %v320, 0.0
        %v359 = vmax.f32 %v323, 0.0
        %v360 = vmax.f32 %v325, 0.0
        %v361 = vmax.f32 %v328, 0.0
        %v362 = vmax.f32 %v330, 0.0
        %v363 = vmax.f32 %v333, 0.0
        %v364 = vmax.f32 %v335, 0.0
        %v365 = vmax.f32 %v338, 0.0
        %v366 = vmax.f32 %v340, 0.0
        %v367 = vmax.f32 %v343, 0.0
        %v368 = vmax.f32 %v345, 0.0
        %v369 = vmax.f32 %v348, 0.0
        %v370 = vmax.f32 %v350, 0.0
        %v371 = vmax.f32 %v353, 0.0
        %v372 = vmax.f32 %v355, 0.0
        %v373 = vpack.c.bf16 %v358, %v357
        %v374 = vpack.c.bf16 %v360, %v359
        %v375 = vpack.c.bf16 %v362, %v361
        %v376 = vpack.c.bf16 %v364, %v363
        %v377 = vpack.c.bf16 %v366, %v365
        %v378 = vpack.c.bf16 %v368, %v367
        %v379 = vpack.c.bf16 %v370, %v369
        %v380 = vpack.c.bf16 %v372, %v371
        %v381 = vld [vmem:[#allocation2] sm:$0xf]
        %v382 = vld [vmem:[#allocation2 + $0x4] sm:$0xf]
        %v383 = vld [vmem:[#allocation2 + $0x8] sm:$0xf]
        %v384 = vld [vmem:[#allocation2 + $0xc] sm:$0xf]
        %v385 = vld [vmem:[#allocation2 + $0x10] sm:$0xf]
        %v386 = vld [vmem:[#allocation2 + $0x14] sm:$0xf]
        %v387 = vld [vmem:[#allocation2 + $0x18] sm:$0xf]
        %v388 = vld [vmem:[#allocation2 + $0x1c] sm:$0xf]
        %v389 = vld [vmem:[#allocation2 + $0x20] sm:$0xf]
        %v390 = vld [vmem:[#allocation2 + $0x24] sm:$0xf]
        %v391 = vld [vmem:[#allocation2 + $0x28] sm:$0xf]
        %v392 = vld [vmem:[#allocation2 + $0x2c] sm:$0xf]
        %v393 = vld [vmem:[#allocation2 + $0x30] sm:$0xf]
        %v394 = vld [vmem:[#allocation2 + $0x34] sm:$0xf]
        %v395 = vld [vmem:[#allocation2 + $0x38] sm:$0xf]
        %v396 = vld [vmem:[#allocation2 + $0x3c] sm:$0xf]
        %v397 = vld [vmem:[%s3 + $0x1] sm:$0x1]
        %v398 = vperm.slane %v397, 0
        %v415 = vunpack.c.l.b16 %v381
        %v416 = vunpack.c.l.b16 %v382
        %v417 = vunpack.c.l.b16 %v383
        %v418 = vunpack.c.l.b16 %v384
        %v419 = vunpack.c.l.b16 %v385
        %v420 = vunpack.c.l.b16 %v386
        %v421 = vunpack.c.l.b16 %v387
        %v422 = vunpack.c.l.b16 %v388
        %v423 = vunpack.c.l.b16 %v389
        %v424 = vunpack.c.l.b16 %v390
        %v425 = vunpack.c.l.b16 %v391
        %v426 = vunpack.c.l.b16 %v392
        %v427 = vunpack.c.l.b16 %v393
        %v428 = vunpack.c.l.b16 %v394
        %v429 = vunpack.c.l.b16 %v395
        %v430 = vunpack.c.l.b16 %v396
        %v431 = vpack.c.b16 %v416, %v415
        %v432 = vpack.c.b16 %v418, %v417
        %v433 = vpack.c.b16 %v420, %v419
        %v434 = vpack.c.b16 %v422, %v421
        %v435 = vpack.c.b16 %v424, %v423
        %v436 = vpack.c.b16 %v426, %v425
        %v437 = vpack.c.b16 %v428, %v427
        %v438 = vpack.c.b16 %v430, %v429
        %447 = vmatpush.bf16.msra.mxu0 %v438
        %448 = vmatpush.bf16.msra.mxu0 %v437
        %449 = vmatpush.bf16.msra.mxu0 %v436
        %450 = vmatpush.bf16.msra.mxu0 %v435
        %451 = vmatpush.bf16.msra.mxu0 %v434
        %452 = vmatpush.bf16.msra.mxu0 %v433
        %453 = vmatpush.bf16.msra.mxu0 %v432
        %454 = vmatpush.bf16.msra.mxu0 %v431
        %455 = vmatmul.bf16.gmra.mxu0 %v373
        %v456 = vpop.f32.mrf.mxu0
        %v457 = vadd.f32 %v398, %v456
        %v458 = vpop.f32.mrf.mxu0
        %v459 = vadd.f32 %v398, %v458
        %460 = vmatmul.bf16.gmra.mxu0 %v374
        %v461 = vpop.f32.mrf.mxu0
        %v462 = vadd.f32 %v398, %v461
        %v463 = vpop.f32.mrf.mxu0
        %v464 = vadd.f32 %v398, %v463
        %465 = vmatmul.bf16.gmra.mxu0 %v375
        %v466 = vpop.f32.mrf.mxu0
        %v467 = vadd.f32 %v398, %v466
        %v468 = vpop.f32.mrf.mxu0
        %v469 = vadd.f32 %v398, %v468
        %470 = vmatmul.bf16.gmra.mxu0 %v376
        %v471 = vpop.f32.mrf.mxu0
        %v472 = vadd.f32 %v398, %v471
        %v473 = vpop.f32.mrf.mxu0
        %v474 = vadd.f32 %v398, %v473
        %475 = vmatmul.bf16.gmra.mxu0 %v377
        %v476 = vpop.f32.mrf.mxu0
        %v477 = vadd.f32 %v398, %v476
        %v478 = vpop.f32.mrf.mxu0
        %v479 = vadd.f32 %v398, %v478
        %480 = vmatmul.bf16.gmra.mxu0 %v378
        %v481 = vpop.f32.mrf.mxu0
        %v482 = vadd.f32 %v398, %v481
        %v483 = vpop.f32.mrf.mxu0
        %v484 = vadd.f32 %v398, %v483
        %485 = vmatmul.bf16.gmra.mxu0 %v379
        %v486 = vpop.f32.mrf.mxu0
        %v487 = vadd.f32 %v398, %v486
        %v488 = vpop.f32.mrf.mxu0
        %v489 = vadd.f32 %v398, %v488
        %490 = vmatmul.bf16.gmra.mxu0 %v380
        %v491 = vpop.f32.mrf.mxu0
        %v492 = vadd.f32 %v398, %v491
        %v493 = vpop.f32.mrf.mxu0
        %v494 = vadd.f32 %v398, %v493
        %495 = vdwg.mxu0
        %v496 = vmax.f32 %v457, 0.0
        %v497 = vmax.f32 %v459, 0.0
        %v498 = vmax.f32 %v462, 0.0
        %v499 = vmax.f32 %v464, 0.0
        %v500 = vmax.f32 %v467, 0.0
        %v501 = vmax.f32 %v469, 0.0
        %v502 = vmax.f32 %v472, 0.0
        %v503 = vmax.f32 %v474, 0.0
        %v504 = vmax.f32 %v477, 0.0
        %v505 = vmax.f32 %v479, 0.0
        %v506 = vmax.f32 %v482, 0.0
        %v507 = vmax.f32 %v484, 0.0
        %v508 = vmax.f32 %v487, 0.0
        %v509 = vmax.f32 %v489, 0.0
        %v510 = vmax.f32 %v492, 0.0
        %v511 = vmax.f32 %v494, 0.0
        %v512 = vpack.c.bf16 %v497, %v496
        %v513 = vpack.c.bf16 %v499, %v498
        %v514 = vpack.c.bf16 %v501, %v500
        %v515 = vpack.c.bf16 %v503, %v502
        %v516 = vpack.c.bf16 %v505, %v504
        %v517 = vpack.c.bf16 %v507, %v506
        %v518 = vpack.c.bf16 %v509, %v508
        %v519 = vpack.c.bf16 %v511, %v510
        %s520 = scalar_lea.vmem [#allocation2], 64
        %v521 = vld [vmem:[%s520] sm:$0xf]
        %v522 = vld [vmem:[%s520 + $0x4] sm:$0xf]
        %v523 = vld [vmem:[%s520 + $0x8] sm:$0xf]
        %v524 = vld [vmem:[%s520 + $0xc] sm:$0xf]
        %v525 = vld [vmem:[%s520 + $0x10] sm:$0xf]
        %v526 = vld [vmem:[%s520 + $0x14] sm:$0xf]
        %v527 = vld [vmem:[%s520 + $0x18] sm:$0xf]
        %v528 = vld [vmem:[%s520 + $0x1c] sm:$0xf]
        %v529 = vld [vmem:[%s520 + $0x20] sm:$0xf]
        %v530 = vld [vmem:[%s520 + $0x24] sm:$0xf]
        %v531 = vld [vmem:[%s520 + $0x28] sm:$0xf]
        %v532 = vld [vmem:[%s520 + $0x2c] sm:$0xf]
        %v533 = vld [vmem:[%s520 + $0x30] sm:$0xf]
        %v534 = vld [vmem:[%s520 + $0x34] sm:$0xf]
        %v535 = vld [vmem:[%s520 + $0x38] sm:$0xf]
        %v536 = vld [vmem:[%s520 + $0x3c] sm:$0xf]
        %v537 = vld [vmem:[%s3 + $0x2] sm:$0x1]
        %v538 = vperm.slane %v537, 0
        %v555 = vunpack.c.l.b16 %v521
        %v556 = vunpack.c.l.b16 %v522
        %v557 = vunpack.c.l.b16 %v523
        %v558 = vunpack.c.l.b16 %v524
        %v559 = vunpack.c.l.b16 %v525
        %v560 = vunpack.c.l.b16 %v526
        %v561 = vunpack.c.l.b16 %v527
        %v562 = vunpack.c.l.b16 %v528
        %v563 = vunpack.c.l.b16 %v529
        %v564 = vunpack.c.l.b16 %v530
        %v565 = vunpack.c.l.b16 %v531
        %v566 = vunpack.c.l.b16 %v532
        %v567 = vunpack.c.l.b16 %v533
        %v568 = vunpack.c.l.b16 %v534
        %v569 = vunpack.c.l.b16 %v535
        %v570 = vunpack.c.l.b16 %v536
        %v571 = vpack.c.b16 %v556, %v555
        %v572 = vpack.c.b16 %v558, %v557
        %v573 = vpack.c.b16 %v560, %v559
        %v574 = vpack.c.b16 %v562, %v561
        %v575 = vpack.c.b16 %v564, %v563
        %v576 = vpack.c.b16 %v566, %v565
        %v577 = vpack.c.b16 %v568, %v567
        %v578 = vpack.c.b16 %v570, %v569
        %587 = vmatpush.bf16.msra.mxu0 %v578
        %588 = vmatpush.bf16.msra.mxu0 %v577
        %589 = vmatpush.bf16.msra.mxu0 %v576
        %590 = vmatpush.bf16.msra.mxu0 %v575
        %591 = vmatpush.bf16.msra.mxu0 %v574
        %592 = vmatpush.bf16.msra.mxu0 %v573
        %593 = vmatpush.bf16.msra.mxu0 %v572
        %594 = vmatpush.bf16.msra.mxu0 %v571
        %595 = vmatmul.bf16.gmra.mxu0 %v512
        %v596 = vpop.f32.mrf.mxu0
        %v597 = vadd.f32 %v538, %v596
        %v598 = vpop.f32.mrf.mxu0
        %v599 = vadd.f32 %v538, %v598
        %600 = vmatmul.bf16.gmra.mxu0 %v513
        %v601 = vpop.f32.mrf.mxu0
        %v602 = vadd.f32 %v538, %v601
        %v603 = vpop.f32.mrf.mxu0
        %v604 = vadd.f32 %v538, %v603
        %605 = vmatmul.bf16.gmra.mxu0 %v514
        %v606 = vpop.f32.mrf.mxu0
        %v607 = vadd.f32 %v538, %v606
        %v608 = vpop.f32.mrf.mxu0
        %v609 = vadd.f32 %v538, %v608
        %610 = vmatmul.bf16.gmra.mxu0 %v515
        %v611 = vpop.f32.mrf.mxu0
        %v612 = vadd.f32 %v538, %v611
        %v613 = vpop.f32.mrf.mxu0
        %v614 = vadd.f32 %v538, %v613
        %615 = vmatmul.bf16.gmra.mxu0 %v516
        %v616 = vpop.f32.mrf.mxu0
        %v617 = vadd.f32 %v538, %v616
        %v618 = vpop.f32.mrf.mxu0
        %v619 = vadd.f32 %v538, %v618
        %620 = vmatmul.bf16.gmra.mxu0 %v517
        %v621 = vpop.f32.mrf.mxu0
        %v622 = vadd.f32 %v538, %v621
        %v623 = vpop.f32.mrf.mxu0
        %v624 = vadd.f32 %v538, %v623
        %625 = vmatmul.bf16.gmra.mxu0 %v518
        %v626 = vpop.f32.mrf.mxu0
        %v627 = vadd.f32 %v538, %v626
        %v628 = vpop.f32.mrf.mxu0
        %v629 = vadd.f32 %v538, %v628
        %630 = vmatmul.bf16.gmra.mxu0 %v519
        %v631 = vpop.f32.mrf.mxu0
        %v632 = vadd.f32 %v538, %v631
        %v633 = vpop.f32.mrf.mxu0
        %v634 = vadd.f32 %v538, %v633
        %635 = vdwg.mxu0
        %v636 = vmax.f32 %v597, 0.0
        %v637 = vmax.f32 %v599, 0.0
        %v638 = vmax.f32 %v602, 0.0
        %v639 = vmax.f32 %v604, 0.0
        %v640 = vmax.f32 %v607, 0.0
        %v641 = vmax.f32 %v609, 0.0
        %v642 = vmax.f32 %v612, 0.0
        %v643 = vmax.f32 %v614, 0.0
        %v644 = vmax.f32 %v617, 0.0
        %v645 = vmax.f32 %v619, 0.0
        %v646 = vmax.f32 %v622, 0.0
        %v647 = vmax.f32 %v624, 0.0
        %v648 = vmax.f32 %v627, 0.0
        %v649 = vmax.f32 %v629, 0.0
        %v650 = vmax.f32 %v632, 0.0
        %v651 = vmax.f32 %v634, 0.0
        %v652 = vpack.c.bf16 %v637, %v636
        %v653 = vpack.c.bf16 %v639, %v638
        %v654 = vpack.c.bf16 %v641, %v640
        %v655 = vpack.c.bf16 %v643, %v642
        %v656 = vpack.c.bf16 %v645, %v644
        %v657 = vpack.c.bf16 %v647, %v646
        %v658 = vpack.c.bf16 %v649, %v648
        %v659 = vpack.c.bf16 %v651, %v650
        %s660 = scalar_lea.vmem [#allocation2], 128
        %v661 = vld [vmem:[%s660] sm:$0xf]
        %v662 = vld [vmem:[%s660 + $0x4] sm:$0xf]
        %v663 = vld [vmem:[%s660 + $0x8] sm:$0xf]
        %v664 = vld [vmem:[%s660 + $0xc] sm:$0xf]
        %v665 = vld [vmem:[%s660 + $0x10] sm:$0xf]
        %v666 = vld [vmem:[%s660 + $0x14] sm:$0xf]
        %v667 = vld [vmem:[%s660 + $0x18] sm:$0xf]
        %v668 = vld [vmem:[%s660 + $0x1c] sm:$0xf]
        %v669 = vld [vmem:[%s660 + $0x20] sm:$0xf]
        %v670 = vld [vmem:[%s660 + $0x24] sm:$0xf]
        %v671 = vld [vmem:[%s660 + $0x28] sm:$0xf]
        %v672 = vld [vmem:[%s660 + $0x2c] sm:$0xf]
        %v673 = vld [vmem:[%s660 + $0x30] sm:$0xf]
        %v674 = vld [vmem:[%s660 + $0x34] sm:$0xf]
        %v675 = vld [vmem:[%s660 + $0x38] sm:$0xf]
        %v676 = vld [vmem:[%s660 + $0x3c] sm:$0xf]
        %v677 = vld [vmem:[%s3 + $0x3] sm:$0x1]
        %v678 = vperm.slane %v677, 0
        %v695 = vunpack.c.l.b16 %v661
        %v696 = vunpack.c.l.b16 %v662
        %v697 = vunpack.c.l.b16 %v663
        %v698 = vunpack.c.l.b16 %v664
        %v699 = vunpack.c.l.b16 %v665
        %v700 = vunpack.c.l.b16 %v666
        %v701 = vunpack.c.l.b16 %v667
        %v702 = vunpack.c.l.b16 %v668
        %v703 = vunpack.c.l.b16 %v669
        %v704 = vunpack.c.l.b16 %v670
        %v705 = vunpack.c.l.b16 %v671
        %v706 = vunpack.c.l.b16 %v672
        %v707 = vunpack.c.l.b16 %v673
        %v708 = vunpack.c.l.b16 %v674
        %v709 = vunpack.c.l.b16 %v675
        %v710 = vunpack.c.l.b16 %v676
        %v711 = vpack.c.b16 %v696, %v695
        %v712 = vpack.c.b16 %v698, %v697
        %v713 = vpack.c.b16 %v700, %v699
        %v714 = vpack.c.b16 %v702, %v701
        %v715 = vpack.c.b16 %v704, %v703
        %v716 = vpack.c.b16 %v706, %v705
        %v717 = vpack.c.b16 %v708, %v707
        %v718 = vpack.c.b16 %v710, %v709
        %727 = vmatpush.bf16.msra.mxu0 %v718
        %728 = vmatpush.bf16.msra.mxu0 %v717
        %729 = vmatpush.bf16.msra.mxu0 %v716
        %730 = vmatpush.bf16.msra.mxu0 %v715
        %731 = vmatpush.bf16.msra.mxu0 %v714
        %732 = vmatpush.bf16.msra.mxu0 %v713
        %733 = vmatpush.bf16.msra.mxu0 %v712
        %734 = vmatpush.bf16.msra.mxu0 %v711
        %735 = vmatmul.bf16.gmra.mxu0 %v652
        %v736 = vpop.f32.mrf.mxu0
        %v737 = vadd.f32 %v678, %v736
        %v738 = vpop.f32.mrf.mxu0
        %v739 = vadd.f32 %v678, %v738
        %740 = vmatmul.bf16.gmra.mxu0 %v653
        %v741 = vpop.f32.mrf.mxu0
        %v742 = vadd.f32 %v678, %v741
        %v743 = vpop.f32.mrf.mxu0
        %v744 = vadd.f32 %v678, %v743
        %745 = vmatmul.bf16.gmra.mxu0 %v654
        %v746 = vpop.f32.mrf.mxu0
        %v747 = vadd.f32 %v678, %v746
        %v748 = vpop.f32.mrf.mxu0
        %v749 = vadd.f32 %v678, %v748
        %750 = vmatmul.bf16.gmra.mxu0 %v655
        %v751 = vpop.f32.mrf.mxu0
        %v752 = vadd.f32 %v678, %v751
        %v753 = vpop.f32.mrf.mxu0
        %v754 = vadd.f32 %v678, %v753
        %755 = vmatmul.bf16.gmra.mxu0 %v656
        %v756 = vpop.f32.mrf.mxu0
        %v757 = vadd.f32 %v678, %v756
        %v758 = vpop.f32.mrf.mxu0
        %v759 = vadd.f32 %v678, %v758
        %760 = vmatmul.bf16.gmra.mxu0 %v657
        %v761 = vpop.f32.mrf.mxu0
        %v762 = vadd.f32 %v678, %v761
        %v763 = vpop.f32.mrf.mxu0
        %v764 = vadd.f32 %v678, %v763
        %765 = vmatmul.bf16.gmra.mxu0 %v658
        %v766 = vpop.f32.mrf.mxu0
        %v767 = vadd.f32 %v678, %v766
        %v768 = vpop.f32.mrf.mxu0
        %v769 = vadd.f32 %v678, %v768
        %770 = vmatmul.bf16.gmra.mxu0 %v659
        %v771 = vpop.f32.mrf.mxu0
        %v772 = vadd.f32 %v678, %v771
        %v773 = vpop.f32.mrf.mxu0
        %v774 = vadd.f32 %v678, %v773
        %775 = vdwg.mxu0
        %v776 = vmax.f32 %v737, 0.0
        %v777 = vmax.f32 %v739, 0.0
        %v778 = vmax.f32 %v742, 0.0
        %v779 = vmax.f32 %v744, 0.0
        %v780 = vmax.f32 %v747, 0.0
        %v781 = vmax.f32 %v749, 0.0
        %v782 = vmax.f32 %v752, 0.0
        %v783 = vmax.f32 %v754, 0.0
        %v784 = vmax.f32 %v757, 0.0
        %v785 = vmax.f32 %v759, 0.0
        %v786 = vmax.f32 %v762, 0.0
        %v787 = vmax.f32 %v764, 0.0
        %v788 = vmax.f32 %v767, 0.0
        %v789 = vmax.f32 %v769, 0.0
        %v790 = vmax.f32 %v772, 0.0
        %v791 = vmax.f32 %v774, 0.0
        %v792 = vpack.c.bf16 %v777, %v776
        %v793 = vpack.c.bf16 %v779, %v778
        %v794 = vpack.c.bf16 %v781, %v780
        %v795 = vpack.c.bf16 %v783, %v782
        %v796 = vpack.c.bf16 %v785, %v784
        %v797 = vpack.c.bf16 %v787, %v786
        %v798 = vpack.c.bf16 %v789, %v788
        %v799 = vpack.c.bf16 %v791, %v790
        %s800 = scalar_lea.vmem [#allocation2], 192
        %v801 = vld [vmem:[%s800] sm:$0xf]
        %v802 = vld [vmem:[%s800 + $0x4] sm:$0xf]
        %v803 = vld [vmem:[%s800 + $0x8] sm:$0xf]
        %v804 = vld [vmem:[%s800 + $0xc] sm:$0xf]
        %v805 = vld [vmem:[%s800 + $0x10] sm:$0xf]
        %v806 = vld [vmem:[%s800 + $0x14] sm:$0xf]
        %v807 = vld [vmem:[%s800 + $0x18] sm:$0xf]
        %v808 = vld [vmem:[%s800 + $0x1c] sm:$0xf]
        %v809 = vld [vmem:[%s800 + $0x20] sm:$0xf]
        %v810 = vld [vmem:[%s800 + $0x24] sm:$0xf]
        %v811 = vld [vmem:[%s800 + $0x28] sm:$0xf]
        %v812 = vld [vmem:[%s800 + $0x2c] sm:$0xf]
        %v813 = vld [vmem:[%s800 + $0x30] sm:$0xf]
        %v814 = vld [vmem:[%s800 + $0x34] sm:$0xf]
        %v815 = vld [vmem:[%s800 + $0x38] sm:$0xf]
        %v816 = vld [vmem:[%s800 + $0x3c] sm:$0xf]
        %v817 = vld [vmem:[%s3 + $0x4] sm:$0x1]
        %v818 = vperm.slane %v817, 0
        %v835 = vunpack.c.l.b16 %v801
        %v836 = vunpack.c.l.b16 %v802
        %v837 = vunpack.c.l.b16 %v803
        %v838 = vunpack.c.l.b16 %v804
        %v839 = vunpack.c.l.b16 %v805
        %v840 = vunpack.c.l.b16 %v806
        %v841 = vunpack.c.l.b16 %v807
        %v842 = vunpack.c.l.b16 %v808
        %v843 = vunpack.c.l.b16 %v809
        %v844 = vunpack.c.l.b16 %v810
        %v845 = vunpack.c.l.b16 %v811
        %v846 = vunpack.c.l.b16 %v812
        %v847 = vunpack.c.l.b16 %v813
        %v848 = vunpack.c.l.b16 %v814
        %v849 = vunpack.c.l.b16 %v815
        %v850 = vunpack.c.l.b16 %v816
        %v851 = vpack.c.b16 %v836, %v835
        %v852 = vpack.c.b16 %v838, %v837
        %v853 = vpack.c.b16 %v840, %v839
        %v854 = vpack.c.b16 %v842, %v841
        %v855 = vpack.c.b16 %v844, %v843
        %v856 = vpack.c.b16 %v846, %v845
        %v857 = vpack.c.b16 %v848, %v847
        %v858 = vpack.c.b16 %v850, %v849
        %867 = vmatpush.bf16.msra.mxu0 %v858
        %868 = vmatpush.bf16.msra.mxu0 %v857
        %869 = vmatpush.bf16.msra.mxu0 %v856
        %870 = vmatpush.bf16.msra.mxu0 %v855
        %871 = vmatpush.bf16.msra.mxu0 %v854
        %872 = vmatpush.bf16.msra.mxu0 %v853
        %873 = vmatpush.bf16.msra.mxu0 %v852
        %874 = vmatpush.bf16.msra.mxu0 %v851
        %875 = vmatmul.bf16.gmra.mxu0 %v792
        %v876 = vpop.f32.mrf.mxu0
        %v877 = vadd.f32 %v818, %v876
        %v878 = vpop.f32.mrf.mxu0
        %v879 = vadd.f32 %v818, %v878
        %880 = vmatmul.bf16.gmra.mxu0 %v793
        %v881 = vpop.f32.mrf.mxu0
        %v882 = vadd.f32 %v818, %v881
        %v883 = vpop.f32.mrf.mxu0
        %v884 = vadd.f32 %v818, %v883
        %885 = vmatmul.bf16.gmra.mxu0 %v794
        %v886 = vpop.f32.mrf.mxu0
        %v887 = vadd.f32 %v818, %v886
        %v888 = vpop.f32.mrf.mxu0
        %v889 = vadd.f32 %v818, %v888
        %890 = vmatmul.bf16.gmra.mxu0 %v795
        %v891 = vpop.f32.mrf.mxu0
        %v892 = vadd.f32 %v818, %v891
        %v893 = vpop.f32.mrf.mxu0
        %v894 = vadd.f32 %v818, %v893
        %895 = vmatmul.bf16.gmra.mxu0 %v796
        %v896 = vpop.f32.mrf.mxu0
        %v897 = vadd.f32 %v818, %v896
        %v898 = vpop.f32.mrf.mxu0
        %v899 = vadd.f32 %v818, %v898
        %900 = vmatmul.bf16.gmra.mxu0 %v797
        %v901 = vpop.f32.mrf.mxu0
        %v902 = vadd.f32 %v818, %v901
        %v903 = vpop.f32.mrf.mxu0
        %v904 = vadd.f32 %v818, %v903
        %905 = vmatmul.bf16.gmra.mxu0 %v798
        %v906 = vpop.f32.mrf.mxu0
        %v907 = vadd.f32 %v818, %v906
        %v908 = vpop.f32.mrf.mxu0
        %v909 = vadd.f32 %v818, %v908
        %910 = vmatmul.bf16.gmra.mxu0 %v799
        %v911 = vpop.f32.mrf.mxu0
        %v912 = vadd.f32 %v818, %v911
        %v913 = vpop.f32.mrf.mxu0
        %v914 = vadd.f32 %v818, %v913
        %915 = vdwg.mxu0
        %916 = vst [vmem:[%s208] sm:$0xff] %v877
        %917 = vst [vmem:[%s208 + $0x8] sm:$0xff] %v879
        %918 = vst [vmem:[%s208 + $0x10] sm:$0xff] %v882
        %919 = vst [vmem:[%s208 + $0x18] sm:$0xff] %v884
        %920 = vst [vmem:[%s208 + $0x20] sm:$0xff] %v887
        %921 = vst [vmem:[%s208 + $0x28] sm:$0xff] %v889
        %922 = vst [vmem:[%s208 + $0x30] sm:$0xff] %v892
        %923 = vst [vmem:[%s208 + $0x38] sm:$0xff] %v894
        %924 = vst [vmem:[%s208 + $0x40] sm:$0xff] %v897
        %925 = vst [vmem:[%s208 + $0x48] sm:$0xff] %v899
        %926 = vst [vmem:[%s208 + $0x50] sm:$0xff] %v902
        %927 = vst [vmem:[%s208 + $0x58] sm:$0xff] %v904
        %928 = vst [vmem:[%s208 + $0x60] sm:$0xff] %v907
        %929 = vst [vmem:[%s208 + $0x68] sm:$0xff] %v909
        %930 = vst [vmem:[%s208 + $0x70] sm:$0xff] %v912
        %931 = vst [vmem:[%s208 + $0x78] sm:$0xff] %v914
        %s932 = sand.u32 %s116, 1
        %s933 = scalar_lea.sflag [#allocation4], %s932
        %s934 = sand.u32 %s116, 1
        %s935 = smul.addr %s934, 128
        %s936 = scalar_lea.vmem [#allocation5], %s935
        // Predicated region
        $region41: #{tpu_custom_call.1} parent=35 // pred_check
          %p937 = pneg %p126
        $region42: #{tpu_custom_call.1} parent=35 // pred_check_branch
          %939 = sbr.rel (%p937) target = $region44
        $region43: #{tpu_custom_call.1} parent=35 // pred_region
          %s940 = smul.u32 16, %s19
          %942 = vsyncadd %s933, 0
          %s943 = smul.addr %s940, 8
          %s944 = scalar_lea.hbm %s4, %s943
          %s945 = sshll.u32 %s936, 4
          %s946 = int_to_ptr.vmem [resolvable:$true] %s945
          %s947 = sshll.u32 %s944, 4
          %s948 = int_to_ptr.hbm [resolvable:$true] %s947
          %953 = dma.vmem_to_hbm [thread:$0]  %s946, 2048, %s948, %s933, 128, 128, 8
        $region44: #{tpu_custom_call.1} parent=35 // pred_fallthru
          _
      $region36: #{tpu_custom_call.1} parent=5 // pred_fallthru
        _
      %p954 = scmp.le.s32.totalorder 2, %s14
      // Predicated region
      $region45: #{tpu_custom_call.1} parent=5 // pred_check
        %p955 = pneg %p954
      $region46: #{tpu_custom_call.1} parent=5 // pred_check_branch
        %957 = sbr.rel (%p955) target = $region48
      $region47: #{tpu_custom_call.1} parent=5 // pred_region
        %s958 = ssub.s32 %s14, 2
        // Predicated region
        $region49: #{tpu_custom_call.1} parent=47 // pred_check
          %p959 = pneg %p132
        $region50: #{tpu_custom_call.1} parent=47 // pred_check_branch
          %961 = sbr.rel (%p959) target = $region52
        $region51: #{tpu_custom_call.1} parent=47 // pred_region
          %s962 = sand.u32 %s117, 1
          %s963 = scalar_lea.sflag [#allocation4], %s962
          %s964 = sand.u32 %s117, 1
          %s965 = smul.addr %s964, 128
          %s966 = scalar_lea.vmem [#allocation5], %s965
          %968 = dma.done %s963, 2048
        $region52: #{tpu_custom_call.1} parent=47 // pred_fallthru
          _
      $region48: #{tpu_custom_call.1} parent=5 // pred_fallthru
        _
    $region6: #{tpu_custom_call.1} parent=1 // loop_footer
      %s18 = sadd.s32 1, %s14
    $region7: #{tpu_custom_call.1} parent=1 // loop_footer_branch
      %13 = sbr.rel target = $region3
    $region8: #{tpu_custom_call.1} parent=1 // loop_exit
      _
    %969 = vsyncpa [#allocation3], 1
    %s970 = scalar_lea.sflag [#allocation3], 1
    %971 = vsyncpa %s970, 1
    %972 = vsyncpa [#allocation4], 1
    %s973 = scalar_lea.sflag [#allocation4], 1
    %974 = vsyncpa %s973, 1

</llo_original>
